<compile_context>
chip_gen: v7x
topology: tpu7x:2x2x1
jax: 0.10.0
libtpu: 0.0.40
codegen_flags: <defaults>
</compile_context>

<pallas_src>
import functools

import jax
import jax.numpy as jnp
from jax.experimental import pallas as pl
from jax.experimental.pallas import tpu as pltpu


def _td_conv3x3_kernel(x_ref, w_ref, b_ref, sdn_ref, sup_ref, o_ref):
    """One block of Nb folded-batch elements.

    x_ref:   (Nb, H, W*C_in)      lane-dense, unpadded input rows
    w_ref:   (3, W*C_in, W*C_out) banded weights, one band per kh tap
    b_ref:   (1, W*C_out)         bias tiled across W
    sdn_ref: (Nb*H, Nb*H)         row shift-down matrix (h-1 rows, edges zeroed)
    sup_ref: (Nb*H, Nb*H)         row shift-up matrix   (h+1 rows, edges zeroed)
    o_ref:   (Nb, H, W*C_out)     lane-dense output rows
    """
    nb, h, k = x_ref.shape
    n_out = o_ref.shape[-1]
    m = nb * h

    x = x_ref[...].reshape(m, k)  # stack rows along sublanes (layout no-op)

    # Neighbouring image rows (h-1 / h+1); rows outside the image are zero
    # because the shift matrices have zero rows at image boundaries.
    x_prev = jnp.dot(sdn_ref[...], x, preferred_element_type=jnp.float32)
    x_next = jnp.dot(sup_ref[...], x, preferred_element_type=jnp.float32)

    # 3 MXU matmuls (kh = 0, 1, 2); kw taps + width padding live in the bands.
    acc = jnp.dot(x, w_ref[1], preferred_element_type=jnp.float32) + b_ref[...]
    acc = acc + jnp.dot(x_prev, w_ref[0], preferred_element_type=jnp.float32)
    acc = acc + jnp.dot(x_next, w_ref[2], preferred_element_type=jnp.float32)

    o_ref[...] = acc.reshape(nb, h, n_out).astype(o_ref.dtype)


def _banded_weights(weight, W):
    """(3,3,C_in,C_out) conv weights -> (3, W*C_in, W*C_out) banded matrices.

    Band kh maps one unpadded input row (W*C_in lanes) to one output row
    (W*C_out lanes); the kw taps and the pad=1 width halo are encoded in the
    band structure (out-of-range taps are simply absent)."""
    _, _, c_in, c_out = weight.shape
    wb = jnp.zeros((3, W * c_in, W * c_out), weight.dtype)
    for kw in range(3):
        for w in range(W):
            w_in = w + kw - 1
            if 0 <= w_in < W:
                wb = wb.at[:, w_in * c_in:(w_in + 1) * c_in,
                           w * c_out:(w + 1) * c_out].set(weight[:, kw])
    return wb


def _shift_matrices(nb, H, dtype):
    """Row-shift matrices over the flattened (Nb*H) row axis.

    (S_dn @ X)[m] = X[m-1] if row m is not the first row of its image else 0
    (S_up @ X)[m] = X[m+1] if row m is not the last  row of its image else 0
    """
    m = nb * H
    r = jnp.arange(m)
    s_dn = ((r[:, None] - 1 == r[None, :]) &
            ((r[:, None] % H) != 0)).astype(dtype)
    s_up = ((r[:, None] + 1 == r[None, :]) &
            ((r[:, None] % H) != H - 1)).astype(dtype)
    return s_dn, s_up


@functools.partial(jax.jit, static_argnames=("block_n",))
def time_distributed_conv2d(x, weight, bias, *, block_n=8):
    """TimeDistributed(Conv2d(3x3, stride 1, pad 1)) forward.

    x:      (bs, seq, C_in, H, W)   -- PyTorch NCHW per time step
    weight: (3, 3, C_in, C_out)     -- HWIO
    bias:   (C_out,)
    returns (bs, seq, C_out, H, W)
    """
    bs, seq, c_in, H, W = x.shape
    c_out = weight.shape[-1]
    n = bs * seq

    nb = min(block_n, n)
    while n % nb:
        nb -= 1
    m = nb * H

    # Fold time into batch (what TimeDistributed.forward does) and fold the
    # channels onto the lane axis in a single transpose pass.  No padding pass.
    x_ld = jnp.transpose(x.reshape(n, c_in, H, W), (0, 2, 3, 1))
    x_ld = x_ld.reshape(n, H, W * c_in)

    w_band = _banded_weights(weight, W)                # (3, W*C_in, W*C_out)
    b_tiled = jnp.tile(bias, W).reshape(1, W * c_out)  # (1, W*C_out)
    s_dn, s_up = _shift_matrices(nb, H, x.dtype)       # (Nb*H, Nb*H)

    out_ld = pl.pallas_call(
        _td_conv3x3_kernel,
        out_shape=jax.ShapeDtypeStruct((n, H, W * c_out), x.dtype),
        grid_spec=pltpu.PrefetchScalarGridSpec(
            num_scalar_prefetch=0,
            grid=(n // nb,),
            in_specs=[
                pl.BlockSpec((nb, H, W * c_in), lambda i: (i, 0, 0)),
                pl.BlockSpec((3, W * c_in, W * c_out), lambda i: (0, 0, 0)),
                pl.BlockSpec((1, W * c_out), lambda i: (0, 0)),
                pl.BlockSpec((m, m), lambda i: (0, 0)),
                pl.BlockSpec((m, m), lambda i: (0, 0)),
            ],
            out_specs=pl.BlockSpec((nb, H, W * c_out), lambda i: (i, 0, 0)),
        ),
        compiler_params=pltpu.CompilerParams(
            dimension_semantics=("parallel",)),
    )(x_ld, w_band, b_tiled, s_dn, s_up)

    # Unfold: (N, H, W*C_out) -> (bs, seq, C_out, H, W) (format_output)
    out = out_ld.reshape(n, H, W, c_out)
    out = jnp.transpose(out, (0, 3, 1, 2))
    return out.reshape(bs, seq, c_out, H, W)


if __name__ == "__main__":
    key = jax.random.PRNGKey(0)
    k_x, k_w, k_b = jax.random.split(key, 3)

    bs, seq, c_in, H, W = 2, 8, 4, 16, 16
    c_out = 8

    x = jax.random.normal(k_x, (bs, seq, c_in, H, W), dtype=jnp.float32)
    # deterministic synthetic Conv2d(4, 8, kernel_size=3, padding=1) params
    weight = jax.random.normal(k_w, (3, 3, c_in, c_out), dtype=jnp.float32) * 0.1
    bias = jax.random.normal(k_b, (c_out,), dtype=jnp.float32) * 0.1

    out = time_distributed_conv2d(x, weight, bias)
    out = jax.block_until_ready(out)

    # reference: fold -> SAME conv -> unfold (exactly TimeDistributed(Conv2d))
    xf = jnp.transpose(x.reshape(bs * seq, c_in, H, W), (0, 2, 3, 1))
    ref = jax.lax.conv_general_dilated(
        xf, weight, window_strides=(1, 1), padding="SAME",
        dimension_numbers=("NHWC", "HWIO", "NHWC")) + bias
    ref = jnp.transpose(ref, (0, 3, 1, 2)).reshape(bs, seq, c_out, H, W)

    assert out.shape == (bs, seq, c_out, H, W)
    assert jnp.allclose(out, ref, atol=1e-4), "mismatch vs reference conv"

    print("KERNEL_OK")
</pallas_src>

<mosaic_0001>
module attributes {stable_mosaic.version = 11 : i64} {
  func.func @_td_conv3x3_kernel(%arg0: i32, %arg1: memref<8x16x64xf32, #tpu.memory_space<vmem>>, %arg2: memref<3x64x128xf32, #tpu.memory_space<vmem>>, %arg3: memref<1x128xf32, #tpu.memory_space<vmem>>, %arg4: memref<128x128xf32, #tpu.memory_space<vmem>>, %arg5: memref<128x128xf32, #tpu.memory_space<vmem>>, %arg6: memref<8x16x128xf32, #tpu.memory_space<vmem>>) attributes {dimension_semantics = [#tpu.dimension_semantics<parallel>], iteration_bounds = array<i64: 2>, scalar_prefetch = 0 : i64, scratch_operands = 0 : i64, tpu.core_type = #tpu.core_type<tc>, window_params = [{transform_indices = @transform_0, window_bounds = array<i64: 8, 16, 64>}, {pipeline_mode = #tpu.pipeline_mode<synchronous>, transform_indices = @transform_1, window_bounds = array<i64: 3, 64, 128>}, {pipeline_mode = #tpu.pipeline_mode<synchronous>, transform_indices = @transform_2, window_bounds = array<i64: 1, 128>}, {pipeline_mode = #tpu.pipeline_mode<synchronous>, transform_indices = @transform_3, window_bounds = array<i64: 128, 128>}, {pipeline_mode = #tpu.pipeline_mode<synchronous>, transform_indices = @transform_4, window_bounds = array<i64: 128, 128>}, {transform_indices = @transform_5, window_bounds = array<i64: 8, 16, 128>}]} {
    %c0 = arith.constant 0 : index
    %c0_0 = arith.constant 0 : index
    %c0_1 = arith.constant 0 : index
    %0 = vector.load %arg1[%c0, %c0_0, %c0_1] : memref<8x16x64xf32, #tpu.memory_space<vmem>>, vector<8x16x64xf32>
    %1 = vector.shape_cast %0 : vector<8x16x64xf32> to vector<128x64xf32>
    %c0_2 = arith.constant 0 : index
    %c0_3 = arith.constant 0 : index
    %2 = vector.load %arg4[%c0_2, %c0_3] : memref<128x128xf32, #tpu.memory_space<vmem>>, vector<128x128xf32>
    %cst = arith.constant dense<0.000000e+00> : vector<128x64xf32>
    %3 = tpu.matmul %2, %1, %cst {dimension_numbers = #tpu.dot_dimension_numbers<[1], [0], [0], [1], [0, 0, 1, 1], [], []>} : vector<128x128xf32>, vector<128x64xf32>, vector<128x64xf32> -> vector<128x64xf32>
    %c0_4 = arith.constant 0 : index
    %c0_5 = arith.constant 0 : index
    %4 = vector.load %arg5[%c0_4, %c0_5] : memref<128x128xf32, #tpu.memory_space<vmem>>, vector<128x128xf32>
    %cst_6 = arith.constant dense<0.000000e+00> : vector<128x64xf32>
    %5 = tpu.matmul %4, %1, %cst_6 {dimension_numbers = #tpu.dot_dimension_numbers<[1], [0], [0], [1], [0, 0, 1, 1], [], []>} : vector<128x128xf32>, vector<128x64xf32>, vector<128x64xf32> -> vector<128x64xf32>
    %c1 = arith.constant 1 : index
    %c0_7 = arith.constant 0 : index
    %c0_8 = arith.constant 0 : index
    %6 = vector.load %arg2[%c1, %c0_7, %c0_8] : memref<3x64x128xf32, #tpu.memory_space<vmem>>, vector<1x64x128xf32>
    %7 = vector.shape_cast %6 : vector<1x64x128xf32> to vector<64x128xf32>
    %cst_9 = arith.constant dense<0.000000e+00> : vector<128x128xf32>
    %8 = tpu.matmul %1, %7, %cst_9 {dimension_numbers = #tpu.dot_dimension_numbers<[1], [0], [0], [1], [0, 0, 1, 1], [], []>} : vector<128x64xf32>, vector<64x128xf32>, vector<128x128xf32> -> vector<128x128xf32>
    %c0_10 = arith.constant 0 : index
    %c0_11 = arith.constant 0 : index
    %9 = vector.load %arg3[%c0_10, %c0_11] : memref<1x128xf32, #tpu.memory_space<vmem>>, vector<1x128xf32>
    %10 = vector.broadcast %9 : vector<1x128xf32> to vector<128x128xf32>
    %11 = arith.addf %8, %10 : vector<128x128xf32>
    %c0_12 = arith.constant 0 : index
    %c0_13 = arith.constant 0 : index
    %c0_14 = arith.constant 0 : index
    %12 = vector.load %arg2[%c0_12, %c0_13, %c0_14] : memref<3x64x128xf32, #tpu.memory_space<vmem>>, vector<1x64x128xf32>
    %13 = vector.shape_cast %12 : vector<1x64x128xf32> to vector<64x128xf32>
    %cst_15 = arith.constant dense<0.000000e+00> : vector<128x128xf32>
    %14 = tpu.matmul %3, %13, %cst_15 {dimension_numbers = #tpu.dot_dimension_numbers<[1], [0], [0], [1], [0, 0, 1, 1], [], []>} : vector<128x64xf32>, vector<64x128xf32>, vector<128x128xf32> -> vector<128x128xf32>
    %15 = arith.addf %11, %14 : vector<128x128xf32>
    %c2 = arith.constant 2 : index
    %c0_16 = arith.constant 0 : index
    %c0_17 = arith.constant 0 : index
    %16 = vector.load %arg2[%c2, %c0_16, %c0_17] : memref<3x64x128xf32, #tpu.memory_space<vmem>>, vector<1x64x128xf32>
    %17 = vector.shape_cast %16 : vector<1x64x128xf32> to vector<64x128xf32>
    %cst_18 = arith.constant dense<0.000000e+00> : vector<128x128xf32>
    %18 = tpu.matmul %5, %17, %cst_18 {dimension_numbers = #tpu.dot_dimension_numbers<[1], [0], [0], [1], [0, 0, 1, 1], [], []>} : vector<128x64xf32>, vector<64x128xf32>, vector<128x128xf32> -> vector<128x128xf32>
    %19 = arith.addf %15, %18 : vector<128x128xf32>
    %20 = vector.shape_cast %19 : vector<128x128xf32> to vector<8x16x128xf32>
    %c0_19 = arith.constant 0 : index
    %c0_20 = arith.constant 0 : index
    %c0_21 = arith.constant 0 : index
    %21 = vector.load %arg6[%c0_19, %c0_20, %c0_21] : memref<8x16x128xf32, #tpu.memory_space<vmem>>, vector<8x16x128xf32>
    tpu.vector_store %arg6[%c0_19, %c0_20, %c0_21], %20 {strides = array<i32>} : memref<8x16x128xf32, #tpu.memory_space<vmem>>, vector<8x16x128xf32>,
    return
  }
  func.func @transform_0(%arg0: i32) -> (i32, i32, i32) {
    %c0_i32 = arith.constant 0 : i32
    %c0_i32_0 = arith.constant 0 : i32
    %c0_i32_1 = arith.constant 0 : i32
    return %arg0, %c0_i32, %c0_i32_0 : i32, i32, i32
  }
  func.func @transform_1(%arg0: i32) -> (i32, i32, i32) {
    %c0_i32 = arith.constant 0 : i32
    %c0_i32_0 = arith.constant 0 : i32
    %c0_i32_1 = arith.constant 0 : i32
    %c0_i32_2 = arith.constant 0 : i32
    return %c0_i32, %c0_i32_0, %c0_i32_1 : i32, i32, i32
  }
  func.func @transform_2(%arg0: i32) -> (i32, i32) {
    %c0_i32 = arith.constant 0 : i32
    %c0_i32_0 = arith.constant 0 : i32
    %c0_i32_1 = arith.constant 0 : i32
    return %c0_i32, %c0_i32_0 : i32, i32
  }
  func.func @transform_3(%arg0: i32) -> (i32, i32) {
    %c0_i32 = arith.constant 0 : i32
    %c0_i32_0 = arith.constant 0 : i32
    %c0_i32_1 = arith.constant 0 : i32
    return %c0_i32, %c0_i32_0 : i32, i32
  }
  func.func @transform_4(%arg0: i32) -> (i32, i32) {
    %c0_i32 = arith.constant 0 : i32
    %c0_i32_0 = arith.constant 0 : i32
    %c0_i32_1 = arith.constant 0 : i32
    return %c0_i32, %c0_i32_0 : i32, i32
  }
  func.func @transform_5(%arg0: i32) -> (i32, i32, i32) {
    %c0_i32 = arith.constant 0 : i32
    %c0_i32_0 = arith.constant 0 : i32
    %c0_i32_1 = arith.constant 0 : i32
    return %arg0, %c0_i32, %c0_i32_0 : i32, i32, i32
  }
}

</mosaic_0001>

<llo_original>
// kernel: tile.8
$region0: #{tile.8}
  #allocation0 [shape = 's32[1]{0}', space=sflag, size = 0x4, scoped, tag = 'scoped memory for tile.8']
  %s0 = inlined_call_operand.vmem [shape: f32[8], index: 0, kind: input, shape index: {}]
  %s1 = inlined_call_operand.vmem [shape: f32[16,8], index: 1, kind: output, shape index: {}]
  // Predicated region
  $region2: #{tile.8} parent=0 // pred_check
    _
  $region3: #{tile.8} parent=0 // pred_check_branch
    %3 = sbr.rel (0) target = $region5
  $region4: #{tile.8} parent=0 // pred_region
    _
  $region5: #{tile.8} parent=0 // pred_fallthru
    _
  %v4 = vld [vmem:[%s0] ss:$0 sm:$0xff]
  %5 = vst [vmem:[%s1] sm:$0xff] %v4
  %s6 = scalar_lea.vmem %s1, 8
  %7 = vst [vmem:[%s6] sm:$0xff] %v4

// kernel: tile.9
$region0: #{tile.9}
  %s0 = inlined_call_operand.vmem [shape: f32[16,8], index: 0, kind: input, shape index: {}]
  %s1 = inlined_call_operand.vmem [shape: f32[1,128], index: 1, kind: output, shape index: {}]
  $region1: #{tile.9} parent=0
    #allocation0 [shape = 'u8[4096]{0}', space=vmem, size = 0x1000, scoped, tag = 'scoped mem for output reshape']
    %v2 = vld [vmem:[%s0] sm:$0x1]
    %vm3 = vcmask 64512
    %4 = vst.msk [vmem:[#allocation0] sm:$0x1] %vm3, %v2
    %s5 = scalar_lea.vmem %s0, 15
    %v6 = vld [vmem:[%s5] sm:$0x1]
    %7 = vrot.lane.b32.xlu0 %v6, 120
    %v8 = vpop.permute.xlu0 %7
    %vm9 = vcmask 1048512
    %10 = vst.msk [vmem:[#allocation0] sm:$0x1] %vm9, %v8
    %s11 = scalar_lea.vmem %s0, 14
    %v12 = vld [vmem:[%s11] sm:$0x1]
    %13 = vrot.lane.b32.xlu0 %v12, 112
    %v14 = vpop.permute.xlu0 %13
    %vm15 = vcmask 982912
    %16 = vst.msk [vmem:[#allocation0] sm:$0x1] %vm15, %v14
    %s17 = scalar_lea.vmem %s0, 13
    %v18 = vld [vmem:[%s17] sm:$0x1]
    %19 = vrot.lane.b32.xlu0 %v18, 104
    %v20 = vpop.permute.xlu0 %19
    %vm21 = vcmask 917312
    %22 = vst.msk [vmem:[#allocation0] sm:$0x1] %vm21, %v20
    %s23 = scalar_lea.vmem %s0, 12
    %v24 = vld [vmem:[%s23] sm:$0x1]
    %25 = vrot.lane.b32.xlu0 %v24, 96
    %v26 = vpop.permute.xlu0 %25
    %vm27 = vcmask 851712
    %28 = vst.msk [vmem:[#allocation0] sm:$0x1] %vm27, %v26
    %s29 = scalar_lea.vmem %s0, 11
    %v30 = vld [vmem:[%s29] sm:$0x1]
    %31 = vrot.lane.b32.xlu0 %v30, 88
    %v32 = vpop.permute.xlu0 %31
    %vm33 = vcmask 786112
    %34 = vst.msk [vmem:[#allocation0] sm:$0x1] %vm33, %v32
    %s35 = scalar_lea.vmem %s0, 10
    %v36 = vld [vmem:[%s35] sm:$0x1]
    %37 = vrot.lane.b32.xlu0 %v36, 80
    %v38 = vpop.permute.xlu0 %37
    %vm39 = vcmask 720512
    %40 = vst.msk [vmem:[#allocation0] sm:$0x1] %vm39, %v38
    %s41 = scalar_lea.vmem %s0, 9
    %v42 = vld [vmem:[%s41] sm:$0x1]
    %43 = vrot.lane.b32.xlu0 %v42, 72
    %v44 = vpop.permute.xlu0 %43
    %vm45 = vcmask 654912
    %46 = vst.msk [vmem:[#allocation0] sm:$0x1] %vm45, %v44
    %s47 = scalar_lea.vmem %s0, 8
    %v48 = vld [vmem:[%s47] sm:$0x1]
    %49 = vrot.lane.b32.xlu0 %v48, 64
    %v50 = vpop.permute.xlu0 %49
    %vm51 = vcmask 589312
    %52 = vst.msk [vmem:[#allocation0] sm:$0x1] %vm51, %v50
    %s53 = scalar_lea.vmem %s0, 7
    %v54 = vld [vmem:[%s53] sm:$0x1]
    %55 = vrot.lane.b32.xlu0 %v54, 56
    %v56 = vpop.permute.xlu0 %55
    %vm57 = vcmask 523712
    %58 = vst.msk [vmem:[#allocation0] sm:$0x1] %vm57, %v56
    %s59 = scalar_lea.vmem %s0, 6
    %v60 = vld [vmem:[%s59] sm:$0x1]
    %61 = vrot.lane.b32.xlu0 %v60, 48
    %v62 = vpop.permute.xlu0 %61
    %vm63 = vcmask 458112
    %64 = vst.msk [vmem:[#allocation0] sm:$0x1] %vm63, %v62
    %s65 = scalar_lea.vmem %s0, 5
    %v66 = vld [vmem:[%s65] sm:$0x1]
    %67 = vrot.lane.b32.xlu0 %v66, 40
    %v68 = vpop.permute.xlu0 %67
    %vm69 = vcmask 392512
    %70 = vst.msk [vmem:[#allocation0] sm:$0x1] %vm69, %v68
    %s71 = scalar_lea.vmem %s0, 4
    %v72 = vld [vmem:[%s71] sm:$0x1]
    %73 = vrot.lane.b32.xlu0 %v72, 32
    %v74 = vpop.permute.xlu0 %73
    %vm75 = vcmask 326912
    %76 = vst.msk [vmem:[#allocation0] sm:$0x1] %vm75, %v74
    %s77 = scalar_lea.vmem %s0, 3
    %v78 = vld [vmem:[%s77] sm:$0x1]
    %79 = vrot.lane.b32.xlu0 %v78, 24
    %v80 = vpop.permute.xlu0 %79
    %vm81 = vcmask 261312
    %82 = vst.msk [vmem:[#allocation0] sm:$0x1] %vm81, %v80
    %s83 = scalar_lea.vmem %s0, 2
    %v84 = vld [vmem:[%s83] sm:$0x1]
    %85 = vrot.lane.b32.xlu0 %v84, 16
    %v86 = vpop.permute.xlu0 %85
    %vm87 = vcmask 195712
    %88 = vst.msk [vmem:[#allocation0] sm:$0x1] %vm87, %v86
    %s89 = scalar_lea.vmem %s0, 1
    %v90 = vld [vmem:[%s89] sm:$0x1]
    %91 = vrot.lane.b32.xlu0 %v90, 8
    %v92 = vpop.permute.xlu0 %91
    %vm93 = vcmask 130112
    %94 = vst.msk [vmem:[#allocation0] sm:$0x1] %vm93, %v92
    %s96 = sshllo.u32 0, 1
    %v98 = vld [vmem:[#allocation0] sm:%s96]
    %s99 = sshllo.u32 0, 1
    %100 = vst [vmem:[%s1] sm:%s99] %v98

// kernel: time_distributed_conv2d.1
$region0: #{time_distributed_conv2d.1}
  #allocation0 [shape = 'u32[]', space=smem, size = 0x4, offset = 0x4, fixed_abs, tag = 'smem constant byte address 0x4 - core index']
  #allocation1 [shape = 'u32[144,128]{1,0:T(1,128)}', space=vmem, size = 0x12000, scoped, tag = 'internal scratch']
  %s0 = inlined_call_operand.vmem [shape: f32[16,16,64], index: 0, kind: input, shape index: {}]
  %s1 = inlined_call_operand.vmem [shape: f32[3,64,128], index: 1, kind: input, shape index: {}]
  %s2 = inlined_call_operand.vmem [shape: f32[1,128], index: 2, kind: input, shape index: {}]
  %s3 = inlined_call_operand.vmem [shape: f32[128,128], index: 3, kind: input, shape index: {}]
  %s4 = inlined_call_operand.vmem [shape: f32[128,128], index: 4, kind: input, shape index: {}]
  %s5 = inlined_call_operand.vmem [shape: f32[16,16,128], index: 5, kind: output, shape index: {}]
  %s6 = sld [smem:[#allocation0]]
  $region53: #{time_distributed_conv2d.1} parent=0
    _
  %s8 = ssub.s32 1, %s6
  %s9 = scalar_select 0, %s8, %s6
  loop: start=0, step=1, limit=4
  $region2: #{time_distributed_conv2d.1} parent=0 // loop_pre_header
    _
  $region3: #{time_distributed_conv2d.1} parent=0 // loop_header
    %s11 = sphi 0, %s15
    %p12 = scmp.ge.s32.totalorder %s11, 4
    %s21 = sphi 0, %s23
    %s24 = sphi 0, %s21
    %s25 = sphi 0, %s24
    %s41 = sphi 0, %s25
    %s45 = sphi 0, %s45
    %s47 = sphi 0, %s45
    %s48 = sphi 0, %s47
    %s62 = sphi 0, %s48
    %s66 = sphi 0, %s66
    %s68 = sphi 0, %s66
    %s69 = sphi 0, %s68
    %s83 = sphi 0, %s69
    %s87 = sphi 0, %s87
    %s89 = sphi 0, %s87
    %s90 = sphi 0, %s89
    %s104 = sphi 0, %s90
    %s108 = sphi 0, %s108
    %s110 = sphi 0, %s108
    %s111 = sphi 0, %s110
    %s125 = sphi 0, %s111
    %s131 = sphi 0, %s133
    %s134 = sphi 0, %s131
    %s135 = sphi 0, %s134
    %s151 = sphi 0, %s135
  $region4: #{time_distributed_conv2d.1} parent=0 // loop_header_branch
    %14 = sbr.rel (%p12) target = $region8
  $region5: #{time_distributed_conv2d.1} parent=0 // loop_body
    %s16 = ssub.s32 %s11, 1
    %s17 = ssub.s32 %s11, 2
    %s18 = sadd.s32 %s11, 1
    %s19 = ssub.s32 %s11, %s18
    %p20 = scmp.eq.s32.totalorder %s19, 0
    %s22 = sadd.s32 %s21, 1
    %s23 = scalar_select %p20, %s21, %s22
    %p26 = pneg %p20
    %p27 = scmp.eq.s32.totalorder %s11, 1
    %p28 = por %p26, %p27
    %p29 = scmp.ne.s32.totalorder %s21, %s24
    %p30 = scmp.eq.s32.totalorder %s11, 0
    %p31 = por %p29, %p30
    %p32 = scmp.ne.s32.totalorder %s21, %s24
    %p33 = scmp.eq.s32.totalorder %s16, 1
    %p34 = por %p32, %p33
    %p35 = scmp.ne.s32.totalorder %s24, %s25
    %p36 = scmp.eq.s32.totalorder %s16, 0
    %p37 = por %p35, %p36
    %p38 = scmp.ne.s32.totalorder %s24, %s25
    %p39 = scmp.eq.s32.totalorder %s17, 1
    %p40 = por %p38, %p39
    %p42 = scmp.ne.s32.totalorder %s25, %s41
    %p43 = scmp.eq.s32.totalorder %s17, 0
    %p44 = por %p42, %p43
    %s46 = sadd.s32 %s45, 1
    %p49 = scmp.eq.s32.totalorder %s11, 1
    %p50 = scmp.ne.s32.totalorder %s45, %s47
    %p51 = scmp.eq.s32.totalorder %s11, 0
    %p52 = por %p50, %p51
    %p53 = scmp.ne.s32.totalorder %s45, %s47
    %p54 = scmp.eq.s32.totalorder %s16, 1
    %p55 = por %p53, %p54
    %p56 = scmp.ne.s32.totalorder %s47, %s48
    %p57 = scmp.eq.s32.totalorder %s16, 0
    %p58 = por %p56, %p57
    %p59 = scmp.ne.s32.totalorder %s47, %s48
    %p60 = scmp.eq.s32.totalorder %s17, 1
    %p61 = por %p59, %p60
    %p63 = scmp.ne.s32.totalorder %s48, %s62
    %p64 = scmp.eq.s32.totalorder %s17, 0
    %p65 = por %p63, %p64
    %s67 = sadd.s32 %s66, 1
    %p70 = scmp.eq.s32.totalorder %s11, 1
    %p71 = scmp.ne.s32.totalorder %s66, %s68
    %p72 = scmp.eq.s32.totalorder %s11, 0
    %p73 = por %p71, %p72
    %p74 = scmp.ne.s32.totalorder %s66, %s68
    %p75 = scmp.eq.s32.totalorder %s16, 1
    %p76 = por %p74, %p75
    %p77 = scmp.ne.s32.totalorder %s68, %s69
    %p78 = scmp.eq.s32.totalorder %s16, 0
    %p79 = por %p77, %p78
    %p80 = scmp.ne.s32.totalorder %s68, %s69
    %p81 = scmp.eq.s32.totalorder %s17, 1
    %p82 = por %p80, %p81
    %p84 = scmp.ne.s32.totalorder %s69, %s83
    %p85 = scmp.eq.s32.totalorder %s17, 0
    %p86 = por %p84, %p85
    %s88 = sadd.s32 %s87, 1
    %p91 = scmp.eq.s32.totalorder %s11, 1
    %p92 = scmp.ne.s32.totalorder %s87, %s89
    %p93 = scmp.eq.s32.totalorder %s11, 0
    %p94 = por %p92, %p93
    %p95 = scmp.ne.s32.totalorder %s87, %s89
    %p96 = scmp.eq.s32.totalorder %s16, 1
    %p97 = por %p95, %p96
    %p98 = scmp.ne.s32.totalorder %s89, %s90
    %p99 = scmp.eq.s32.totalorder %s16, 0
    %p100 = por %p98, %p99
    %p101 = scmp.ne.s32.totalorder %s89, %s90
    %p102 = scmp.eq.s32.totalorder %s17, 1
    %p103 = por %p101, %p102
    %p105 = scmp.ne.s32.totalorder %s90, %s104
    %p106 = scmp.eq.s32.totalorder %s17, 0
    %p107 = por %p105, %p106
    %s109 = sadd.s32 %s108, 1
    %p112 = scmp.eq.s32.totalorder %s11, 1
    %p113 = scmp.ne.s32.totalorder %s108, %s110
    %p114 = scmp.eq.s32.totalorder %s11, 0
    %p115 = por %p113, %p114
    %p116 = scmp.ne.s32.totalorder %s108, %s110
    %p117 = scmp.eq.s32.totalorder %s16, 1
    %p118 = por %p116, %p117
    %p119 = scmp.ne.s32.totalorder %s110, %s111
    %p120 = scmp.eq.s32.totalorder %s16, 0
    %p121 = por %p119, %p120
    %p122 = scmp.ne.s32.totalorder %s110, %s111
    %p123 = scmp.eq.s32.totalorder %s17, 1
    %p124 = por %p122, %p123
    %p126 = scmp.ne.s32.totalorder %s111, %s125
    %p127 = scmp.eq.s32.totalorder %s17, 0
    %p128 = por %p126, %p127
    %s129 = ssub.s32 %s11, %s18
    %p130 = scmp.eq.s32.totalorder %s129, 0
    %s132 = sadd.s32 %s131, 1
    %s133 = scalar_select %p130, %s131, %s132
    %p136 = pneg %p130
    %p137 = scmp.eq.s32.totalorder %s11, 1
    %p138 = por %p136, %p137
    %p139 = scmp.ne.s32.totalorder %s131, %s134
    %p140 = scmp.eq.s32.totalorder %s11, 0
    %p141 = por %p139, %p140
    %p142 = scmp.ne.s32.totalorder %s131, %s134
    %p143 = scmp.eq.s32.totalorder %s16, 1
    %p144 = por %p142, %p143
    %p145 = scmp.ne.s32.totalorder %s134, %s135
    %p146 = scmp.eq.s32.totalorder %s16, 0
    %p147 = por %p145, %p146
    %p148 = scmp.ne.s32.totalorder %s134, %s135
    %p149 = scmp.eq.s32.totalorder %s17, 1
    %p150 = por %p148, %p149
    %p152 = scmp.ne.s32.totalorder %s135, %s151
    %p153 = scmp.eq.s32.totalorder %s17, 0
    %p154 = por %p152, %p153
    %p155 = scmp.le.s32.totalorder 1, %s11
    %p156 = scmp.lt.s32.totalorder %s11, 3
    %p157 = pnand %p155, %p156
    %p158 = pneg %p157
    // Predicated region
    $region9: #{time_distributed_conv2d.1} parent=5 // pred_check
      _
    $region10: #{time_distributed_conv2d.1} parent=5 // pred_check_branch
      %160 = sbr.rel (%p157) target = $region12
    $region11: #{time_distributed_conv2d.1} parent=5 // pred_region
      %s161 = ssub.s32 %s11, 1
      // Predicated region
      $region13: #{time_distributed_conv2d.1} parent=11 // pred_check
        %p162 = pneg %p58
      $region14: #{time_distributed_conv2d.1} parent=11 // pred_check_branch
        %164 = sbr.rel (%p162) target = $region16
      $region15: #{time_distributed_conv2d.1} parent=11 // pred_region
        _
      $region16: #{time_distributed_conv2d.1} parent=11 // pred_fallthru
        _
      // Predicated region
      $region17: #{time_distributed_conv2d.1} parent=11 // pred_check
        %p165 = pneg %p79
      $region18: #{time_distributed_conv2d.1} parent=11 // pred_check_branch
        %167 = sbr.rel (%p165) target = $region20
      $region19: #{time_distributed_conv2d.1} parent=11 // pred_region
        _
      $region20: #{time_distributed_conv2d.1} parent=11 // pred_fallthru
        _
      // Predicated region
      $region21: #{time_distributed_conv2d.1} parent=11 // pred_check
        %p168 = pneg %p100
      $region22: #{time_distributed_conv2d.1} parent=11 // pred_check_branch
        %170 = sbr.rel (%p168) target = $region24
      $region23: #{time_distributed_conv2d.1} parent=11 // pred_region
        _
      $region24: #{time_distributed_conv2d.1} parent=11 // pred_fallthru
        _
      // Predicated region
      $region25: #{time_distributed_conv2d.1} parent=11 // pred_check
        %p171 = pneg %p121
      $region26: #{time_distributed_conv2d.1} parent=11 // pred_check_branch
        %173 = sbr.rel (%p171) target = $region28
      $region27: #{time_distributed_conv2d.1} parent=11 // pred_region
        _
      $region28: #{time_distributed_conv2d.1} parent=11 // pred_fallthru
        _
    $region12: #{time_distributed_conv2d.1} parent=5 // pred_fallthru
      _
    %p174 = scmp.lt.s32.totalorder %s11, 2
    // Predicated region
    $region29: #{time_distributed_conv2d.1} parent=5 // pred_check
      %p175 = pneg %p174
    $region30: #{time_distributed_conv2d.1} parent=5 // pred_check_branch
      %177 = sbr.rel (%p175) target = $region32
    $region31: #{time_distributed_conv2d.1} parent=5 // pred_region
      // Predicated region
      $region33: #{time_distributed_conv2d.1} parent=31 // pred_check
        %p178 = pneg %p31
      $region34: #{time_distributed_conv2d.1} parent=31 // pred_check_branch
        %180 = sbr.rel (%p178) target = $region36
      $region35: #{time_distributed_conv2d.1} parent=31 // pred_region
        %s181 = smul.u32 8, %s11
        %p182 = scmp.lt.s32.totalorder %s181, 15
        %s183 = scalar_select %p182, %s181, 15
        %s184 = smul.addr %s183, 2
        %s185 = smul.addr %s184, 8
        %s186 = scalar_lea.vmem %s0, %s185
        %s187 = smul.u32 8, %s11
      $region36: #{time_distributed_conv2d.1} parent=31 // pred_fallthru
        _
    $region32: #{time_distributed_conv2d.1} parent=5 // pred_fallthru
      _
    %p188 = scmp.le.s32.totalorder 1, %s11
    %p189 = scmp.lt.s32.totalorder %s11, 3
    %p190 = pnand %p188, %p189
    %p191 = pneg %p190
    // Predicated region
    $region37: #{time_distributed_conv2d.1} parent=5 // pred_check
      _
    $region38: #{time_distributed_conv2d.1} parent=5 // pred_check_branch
      %193 = sbr.rel (%p190) target = $region40
    $region39: #{time_distributed_conv2d.1} parent=5 // pred_region
      %s194 = ssub.s32 %s11, 1
      %s195 = smul.u32 8, %s16
      %p196 = scmp.lt.s32.totalorder %s195, 15
      %s197 = scalar_select %p196, %s195, 15
      %s198 = smul.addr %s197, 2
      %s199 = smul.addr %s198, 8
      %s200 = scalar_lea.vmem %s0, %s199
      %p201 = pneg %p37
      %p202 = pneg %p34
      %p203 = pneg %p58
      %p204 = pneg %p55
      %p205 = pneg %p79
      %p206 = pneg %p76
      %p207 = pneg %p100
      %p208 = pneg %p97
      %p209 = pneg %p121
      %p210 = pneg %p118
      %p211 = pneg %p147
      %p212 = pneg %p144
      %s213 = smul.u32 8, %s16
      %p214 = scmp.lt.s32.totalorder %s213, 15
      %s215 = scalar_select %p214, %s213, 15
      %s216 = smul.addr %s215, 2
      %s217 = smul.addr %s216, 8
      %s218 = scalar_lea.vmem %s5, %s217
      %s219 = smul.u32 8, %s16
      %p220 = scmp.lt.s32.totalorder %s219, 15
      %s221 = scalar_select %p220, %s219, 15
      %s222 = smul.addr %s221, 2
      %s223 = smul.addr %s222, 8
      %s224 = scalar_lea.vmem %s0, %s223
      %s225 = smul.u32 8, %s16
      %s226 = smul.u32 8, %s16
      %p227 = scmp.lt.s32.totalorder %s226, 15
      %s228 = scalar_select %p227, %s226, 15
      %s229 = smul.addr %s228, 2
      %s230 = smul.addr %s229, 8
      %s231 = scalar_lea.vmem %s5, %s230
      %s232 = smul.u32 8, %s16
      %v233 = vld [vmem:[%s224] sm:$0xff]
      %v234 = vld [vmem:[%s224 + $0x8] sm:$0xff]
      %v235 = vld [vmem:[%s224 + $0x10] sm:$0xff]
      %v236 = vld [vmem:[%s224 + $0x18] sm:$0xff]
      %v237 = vld [vmem:[%s224 + $0x20] sm:$0xff]
      %v238 = vld [vmem:[%s224 + $0x28] sm:$0xff]
      %v239 = vld [vmem:[%s224 + $0x30] sm:$0xff]
      %v240 = vld [vmem:[%s224 + $0x38] sm:$0xff]
      %v241 = vld [vmem:[%s224 + $0x40] sm:$0xff]
      %v242 = vld [vmem:[%s224 + $0x48] sm:$0xff]
      %v243 = vld [vmem:[%s224 + $0x50] sm:$0xff]
      %v244 = vld [vmem:[%s224 + $0x58] sm:$0xff]
      %v245 = vld [vmem:[%s224 + $0x60] sm:$0xff]
      %v246 = vld [vmem:[%s224 + $0x68] sm:$0xff]
      %v247 = vld [vmem:[%s224 + $0x70] sm:$0xff]
      %v248 = vld [vmem:[%s224 + $0x78] sm:$0xff]
      %v249 = vld [vmem:[%s3] sm:$0xff]
      %v250 = vld [vmem:[%s3 + $0x8] sm:$0xff]
      %v251 = vld [vmem:[%s3 + $0x10] sm:$0xff]
      %v252 = vld [vmem:[%s3 + $0x18] sm:$0xff]
      %v253 = vld [vmem:[%s3 + $0x20] sm:$0xff]
      %v254 = vld [vmem:[%s3 + $0x28] sm:$0xff]
      %v255 = vld [vmem:[%s3 + $0x30] sm:$0xff]
      %v256 = vld [vmem:[%s3 + $0x38] sm:$0xff]
      %v257 = vld [vmem:[%s3 + $0x40] sm:$0xff]
      %v258 = vld [vmem:[%s3 + $0x48] sm:$0xff]
      %v259 = vld [vmem:[%s3 + $0x50] sm:$0xff]
      %v260 = vld [vmem:[%s3 + $0x58] sm:$0xff]
      %v261 = vld [vmem:[%s3 + $0x60] sm:$0xff]
      %v262 = vld [vmem:[%s3 + $0x68] sm:$0xff]
      %v263 = vld [vmem:[%s3 + $0x70] sm:$0xff]
      %v264 = vld [vmem:[%s3 + $0x78] sm:$0xff]
      %265 = vmatprep.subr.mxu0 0.0
      %266 = vmatpush1.msra.mxu0 %v233
      %267 = vmatprep.subr.mxu0 0.0
      %268 = vmatpush1.msra.mxu0 %v234
      %269 = vmatprep.subr.mxu0 0.0
      %270 = vmatpush1.msra.mxu0 %v235
      %271 = vmatprep.subr.mxu0 0.0
      %272 = vmatpush1.msra.mxu0 %v236
      %273 = vmatprep.subr.mxu0 0.0
      %274 = vmatpush1.msra.mxu0 %v237
      %275 = vmatprep.subr.mxu0 0.0
      %276 = vmatpush1.msra.mxu0 %v238
      %277 = vmatprep.subr.mxu0 0.0
      %278 = vmatpush1.msra.mxu0 %v239
      %279 = vmatprep.subr.mxu0 0.0
      %280 = vmatpush1.msra.mxu0 %v240
      %281 = vmatprep.subr.mxu0 0.0
      %282 = vmatpush1.msra.mxu0 %v241
      %283 = vmatprep.subr.mxu0 0.0
      %284 = vmatpush1.msra.mxu0 %v242
      %285 = vmatprep.subr.mxu0 0.0
      %286 = vmatpush1.msra.mxu0 %v243
      %287 = vmatprep.subr.mxu0 0.0
      %288 = vmatpush1.msra.mxu0 %v244
      %289 = vmatprep.subr.mxu0 0.0
      %290 = vmatpush1.msra.mxu0 %v245
      %291 = vmatprep.subr.mxu0 0.0
      %292 = vmatpush1.msra.mxu0 %v246
      %293 = vmatprep.subr.mxu0 0.0
      %294 = vmatpush1.msra.mxu0 %v247
      %295 = vmatprep.subr.mxu0 0.0
      %296 = vmatpush1.msra.mxu0 %v248
      %297 = vmatprep.subr.mxu0 0.0
      %298 = vmatpush1.msra.mxu0 0.0
      %299 = vmatprep.subr.mxu0 0.0
      %300 = vmatpush1.msra.mxu0 0.0
      %301 = vmatprep.subr.mxu0 0.0
      %302 = vmatpush1.msra.mxu0 0.0
      %303 = vmatprep.subr.mxu0 0.0
      %304 = vmatpush1.msra.mxu0 0.0
      %305 = vmatprep.subr.mxu0 0.0
      %306 = vmatpush1.msra.mxu0 0.0
      %307 = vmatprep.subr.mxu0 0.0
      %308 = vmatpush1.msra.mxu0 0.0
      %309 = vmatprep.subr.mxu0 0.0
      %310 = vmatpush1.msra.mxu0 0.0
      %311 = vmatprep.subr.mxu0 0.0
      %312 = vmatpush1.msra.mxu0 0.0
      %313 = vmatprep.subr.mxu0 0.0
      %314 = vmatpush1.msra.mxu0 0.0
      %315 = vmatprep.subr.mxu0 0.0
      %316 = vmatpush1.msra.mxu0 0.0
      %317 = vmatprep.subr.mxu0 0.0
      %318 = vmatpush1.msra.mxu0 0.0
      %319 = vmatprep.subr.mxu0 0.0
      %320 = vmatpush1.msra.mxu0 0.0
      %321 = vmatprep.subr.mxu0 0.0
      %322 = vmatpush1.msra.mxu0 0.0
      %323 = vmatprep.subr.mxu0 0.0
      %324 = vmatpush1.msra.mxu0 0.0
      %325 = vmatprep.subr.mxu0 0.0
      %326 = vmatpush1.msra.mxu0 0.0
      %327 = vmatprep.subr.mxu0 0.0
      %328 = vmatpush1.msra.mxu0 0.0
      %329 = vmatprep.mubr.f32.mxu0 0.0
      %330 = vmatmul.mubr.f32.gmra.mrb[0].mxu0 %v249
      %v331 = vpop.f32.mrb[0].mxu0
      %v332 = vadd.f32 0.0, %v331
      %v333 = vpop.f32.mrb[0].mxu0
      %334 = vmatprep.mubr.f32.mxu0 0.0
      %335 = vmatmul.mubr.f32.gmra.mrb[0].mxu0 %v250
      %v336 = vpop.f32.mrb[0].mxu0
      %v337 = vadd.f32 0.0, %v336
      %v338 = vpop.f32.mrb[0].mxu0
      %339 = vmatprep.mubr.f32.mxu0 0.0
      %340 = vmatmul.mubr.f32.gmra.mrb[0].mxu0 %v251
      %v341 = vpop.f32.mrb[0].mxu0
      %v342 = vadd.f32 0.0, %v341
      %v343 = vpop.f32.mrb[0].mxu0
      %344 = vmatprep.mubr.f32.mxu0 0.0
      %345 = vmatmul.mubr.f32.gmra.mrb[0].mxu0 %v252
      %v346 = vpop.f32.mrb[0].mxu0
      %v347 = vadd.f32 0.0, %v346
      %v348 = vpop.f32.mrb[0].mxu0
      %349 = vmatprep.mubr.f32.mxu0 0.0
      %350 = vmatmul.mubr.f32.gmra.mrb[0].mxu0 %v253
      %v351 = vpop.f32.mrb[0].mxu0
      %v352 = vadd.f32 0.0, %v351
      %v353 = vpop.f32.mrb[0].mxu0
      %354 = vmatprep.mubr.f32.mxu0 0.0
      %355 = vmatmul.mubr.f32.gmra.mrb[0].mxu0 %v254
      %v356 = vpop.f32.mrb[0].mxu0
      %v357 = vadd.f32 0.0, %v356
      %v358 = vpop.f32.mrb[0].mxu0
      %359 = vmatprep.mubr.f32.mxu0 0.0
      %360 = vmatmul.mubr.f32.gmra.mrb[0].mxu0 %v255
      %v361 = vpop.f32.mrb[0].mxu0
      %v362 = vadd.f32 0.0, %v361
      %v363 = vpop.f32.mrb[0].mxu0
      %364 = vmatprep.mubr.f32.mxu0 0.0
      %365 = vmatmul.mubr.f32.gmra.mrb[0].mxu0 %v256
      %v366 = vpop.f32.mrb[0].mxu0
      %v367 = vadd.f32 0.0, %v366
      %v368 = vpop.f32.mrb[0].mxu0
      %369 = vmatprep.mubr.f32.mxu0 0.0
      %370 = vmatmul.mubr.f32.gmra.mrb[0].mxu0 %v257
      %v371 = vpop.f32.mrb[0].mxu0
      %v372 = vadd.f32 0.0, %v371
      %v373 = vpop.f32.mrb[0].mxu0
      %374 = vmatprep.mubr.f32.mxu0 0.0
      %375 = vmatmul.mubr.f32.gmra.mrb[0].mxu0 %v258
      %v376 = vpop.f32.mrb[0].mxu0
      %v377 = vadd.f32 0.0, %v376
      %v378 = vpop.f32.mrb[0].mxu0
      %379 = vmatprep.mubr.f32.mxu0 0.0
      %380 = vmatmul.mubr.f32.gmra.mrb[0].mxu0 %v259
      %v381 = vpop.f32.mrb[0].mxu0
      %v382 = vadd.f32 0.0, %v381
      %v383 = vpop.f32.mrb[0].mxu0
      %384 = vmatprep.mubr.f32.mxu0 0.0
      %385 = vmatmul.mubr.f32.gmra.mrb[0].mxu0 %v260
      %v386 = vpop.f32.mrb[0].mxu0
      %v387 = vadd.f32 0.0, %v386
      %v388 = vpop.f32.mrb[0].mxu0
      %389 = vmatprep.mubr.f32.mxu0 0.0
      %390 = vmatmul.mubr.f32.gmra.mrb[0].mxu0 %v261
      %v391 = vpop.f32.mrb[0].mxu0
      %v392 = vadd.f32 0.0, %v391
      %v393 = vpop.f32.mrb[0].mxu0
      %394 = vmatprep.mubr.f32.mxu0 0.0
      %395 = vmatmul.mubr.f32.gmra.mrb[0].mxu0 %v262
      %v396 = vpop.f32.mrb[0].mxu0
      %v397 = vadd.f32 0.0, %v396
      %v398 = vpop.f32.mrb[0].mxu0
      %399 = vmatprep.mubr.f32.mxu0 0.0
      %400 = vmatmul.mubr.f32.gmra.mrb[0].mxu0 %v263
      %v401 = vpop.f32.mrb[0].mxu0
      %v402 = vadd.f32 0.0, %v401
      %v403 = vpop.f32.mrb[0].mxu0
      %404 = vmatprep.mubr.f32.mxu0 0.0
      %405 = vmatmul.mubr.f32.gmra.mrb[0].mxu0 %v264
      %v406 = vpop.f32.mrb[0].mxu0
      %v407 = vadd.f32 0.0, %v406
      %v408 = vpop.f32.mrb[0].mxu0
      %409 = vdwg.mxu0
      %v410 = vld [vmem:[%s4] sm:$0xff]
      %v411 = vld [vmem:[%s4 + $0x8] sm:$0xff]
      %v412 = vld [vmem:[%s4 + $0x10] sm:$0xff]
      %v413 = vld [vmem:[%s4 + $0x18] sm:$0xff]
      %v414 = vld [vmem:[%s4 + $0x20] sm:$0xff]
      %v415 = vld [vmem:[%s4 + $0x28] sm:$0xff]
      %v416 = vld [vmem:[%s4 + $0x30] sm:$0xff]
      %v417 = vld [vmem:[%s4 + $0x38] sm:$0xff]
      %v418 = vld [vmem:[%s4 + $0x40] sm:$0xff]
      %v419 = vld [vmem:[%s4 + $0x48] sm:$0xff]
      %v420 = vld [vmem:[%s4 + $0x50] sm:$0xff]
      %v421 = vld [vmem:[%s4 + $0x58] sm:$0xff]
      %v422 = vld [vmem:[%s4 + $0x60] sm:$0xff]
      %v423 = vld [vmem:[%s4 + $0x68] sm:$0xff]
      %v424 = vld [vmem:[%s4 + $0x70] sm:$0xff]
      %v425 = vld [vmem:[%s4 + $0x78] sm:$0xff]
      %426 = vmatprep.subr.mxu0 0.0
      %427 = vmatpush1.msra.mxu0 %v233
      %428 = vmatprep.subr.mxu0 0.0
      %429 = vmatpush1.msra.mxu0 %v234
      %430 = vmatprep.subr.mxu0 0.0
      %431 = vmatpush1.msra.mxu0 %v235
      %432 = vmatprep.subr.mxu0 0.0
      %433 = vmatpush1.msra.mxu0 %v236
      %434 = vmatprep.subr.mxu0 0.0
      %435 = vmatpush1.msra.mxu0 %v237
      %436 = vmatprep.subr.mxu0 0.0
      %437 = vmatpush1.msra.mxu0 %v238
      %438 = vmatprep.subr.mxu0 0.0
      %439 = vmatpush1.msra.mxu0 %v239
      %440 = vmatprep.subr.mxu0 0.0
      %441 = vmatpush1.msra.mxu0 %v240
      %442 = vmatprep.subr.mxu0 0.0
      %443 = vmatpush1.msra.mxu0 %v241
      %444 = vmatprep.subr.mxu0 0.0
      %445 = vmatpush1.msra.mxu0 %v242
      %446 = vmatprep.subr.mxu0 0.0
      %447 = vmatpush1.msra.mxu0 %v243
      %448 = vmatprep.subr.mxu0 0.0
      %449 = vmatpush1.msra.mxu0 %v244
      %450 = vmatprep.subr.mxu0 0.0
      %451 = vmatpush1.msra.mxu0 %v245
      %452 = vmatprep.subr.mxu0 0.0
      %453 = vmatpush1.msra.mxu0 %v246
      %454 = vmatprep.subr.mxu0 0.0
      %455 = vmatpush1.msra.mxu0 %v247
      %456 = vmatprep.subr.mxu0 0.0
      %457 = vmatpush1.msra.mxu0 %v248
      %458 = vmatprep.subr.mxu0 0.0
      %459 = vmatpush1.msra.mxu0 0.0
      %460 = vmatprep.subr.mxu0 0.0
      %461 = vmatpush1.msra.mxu0 0.0
      %462 = vmatprep.subr.mxu0 0.0
      %463 = vmatpush1.msra.mxu0 0.0
      %464 = vmatprep.subr.mxu0 0.0
      %465 = vmatpush1.msra.mxu0 0.0
      %466 = vmatprep.subr.mxu0 0.0
      %467 = vmatpush1.msra.mxu0 0.0
      %468 = vmatprep.subr.mxu0 0.0
      %469 = vmatpush1.msra.mxu0 0.0
      %470 = vmatprep.subr.mxu0 0.0
      %471 = vmatpush1.msra.mxu0 0.0
      %472 = vmatprep.subr.mxu0 0.0
      %473 = vmatpush1.msra.mxu0 0.0
      %474 = vmatprep.subr.mxu0 0.0
      %475 = vmatpush1.msra.mxu0 0.0
      %476 = vmatprep.subr.mxu0 0.0
      %477 = vmatpush1.msra.mxu0 0.0
      %478 = vmatprep.subr.mxu0 0.0
      %479 = vmatpush1.msra.mxu0 0.0
      %480 = vmatprep.subr.mxu0 0.0
      %481 = vmatpush1.msra.mxu0 0.0
      %482 = vmatprep.subr.mxu0 0.0
      %483 = vmatpush1.msra.mxu0 0.0
      %484 = vmatprep.subr.mxu0 0.0
      %485 = vmatpush1.msra.mxu0 0.0
      %486 = vmatprep.subr.mxu0 0.0
      %487 = vmatpush1.msra.mxu0 0.0
      %488 = vmatprep.subr.mxu0 0.0
      %489 = vmatpush1.msra.mxu0 0.0
      %490 = vmatprep.mubr.f32.mxu0 0.0
      %491 = vmatmul.mubr.f32.gmra.mrb[0].mxu0 %v410
      %v492 = vpop.f32.mrb[0].mxu0
      %v493 = vadd.f32 0.0, %v492
      %v494 = vpop.f32.mrb[0].mxu0
      %495 = vmatprep.mubr.f32.mxu0 0.0
      %496 = vmatmul.mubr.f32.gmra.mrb[0].mxu0 %v411
      %v497 = vpop.f32.mrb[0].mxu0
      %v498 = vadd.f32 0.0, %v497
      %v499 = vpop.f32.mrb[0].mxu0
      %500 = vmatprep.mubr.f32.mxu0 0.0
      %501 = vmatmul.mubr.f32.gmra.mrb[0].mxu0 %v412
      %v502 = vpop.f32.mrb[0].mxu0
      %v503 = vadd.f32 0.0, %v502
      %v504 = vpop.f32.mrb[0].mxu0
      %505 = vmatprep.mubr.f32.mxu0 0.0
      %506 = vmatmul.mubr.f32.gmra.mrb[0].mxu0 %v413
      %v507 = vpop.f32.mrb[0].mxu0
      %v508 = vadd.f32 0.0, %v507
      %v509 = vpop.f32.mrb[0].mxu0
      %510 = vmatprep.mubr.f32.mxu0 0.0
      %511 = vmatmul.mubr.f32.gmra.mrb[0].mxu0 %v414
      %v512 = vpop.f32.mrb[0].mxu0
      %v513 = vadd.f32 0.0, %v512
      %v514 = vpop.f32.mrb[0].mxu0
      %515 = vmatprep.mubr.f32.mxu0 0.0
      %516 = vmatmul.mubr.f32.gmra.mrb[0].mxu0 %v415
      %v517 = vpop.f32.mrb[0].mxu0
      %v518 = vadd.f32 0.0, %v517
      %v519 = vpop.f32.mrb[0].mxu0
      %520 = vmatprep.mubr.f32.mxu0 0.0
      %521 = vmatmul.mubr.f32.gmra.mrb[0].mxu0 %v416
      %v522 = vpop.f32.mrb[0].mxu0
      %v523 = vadd.f32 0.0, %v522
      %v524 = vpop.f32.mrb[0].mxu0
      %525 = vmatprep.mubr.f32.mxu0 0.0
      %526 = vmatmul.mubr.f32.gmra.mrb[0].mxu0 %v417
      %v527 = vpop.f32.mrb[0].mxu0
      %v528 = vadd.f32 0.0, %v527
      %v529 = vpop.f32.mrb[0].mxu0
      %530 = vmatprep.mubr.f32.mxu0 0.0
      %531 = vmatmul.mubr.f32.gmra.mrb[0].mxu0 %v418
      %v532 = vpop.f32.mrb[0].mxu0
      %v533 = vadd.f32 0.0, %v532
      %v534 = vpop.f32.mrb[0].mxu0
      %535 = vmatprep.mubr.f32.mxu0 0.0
      %536 = vmatmul.mubr.f32.gmra.mrb[0].mxu0 %v419
      %v537 = vpop.f32.mrb[0].mxu0
      %v538 = vadd.f32 0.0, %v537
      %v539 = vpop.f32.mrb[0].mxu0
      %540 = vmatprep.mubr.f32.mxu0 0.0
      %541 = vmatmul.mubr.f32.gmra.mrb[0].mxu0 %v420
      %v542 = vpop.f32.mrb[0].mxu0
      %v543 = vadd.f32 0.0, %v542
      %v544 = vpop.f32.mrb[0].mxu0
      %545 = vmatprep.mubr.f32.mxu0 0.0
      %546 = vmatmul.mubr.f32.gmra.mrb[0].mxu0 %v421
      %v547 = vpop.f32.mrb[0].mxu0
      %v548 = vadd.f32 0.0, %v547
      %v549 = vpop.f32.mrb[0].mxu0
      %550 = vmatprep.mubr.f32.mxu0 0.0
      %551 = vmatmul.mubr.f32.gmra.mrb[0].mxu0 %v422
      %v552 = vpop.f32.mrb[0].mxu0
      %v553 = vadd.f32 0.0, %v552
      %v554 = vpop.f32.mrb[0].mxu0
      %555 = vmatprep.mubr.f32.mxu0 0.0
      %556 = vmatmul.mubr.f32.gmra.mrb[0].mxu0 %v423
      %v557 = vpop.f32.mrb[0].mxu0
      %v558 = vadd.f32 0.0, %v557
      %v559 = vpop.f32.mrb[0].mxu0
      %560 = vmatprep.mubr.f32.mxu0 0.0
      %561 = vmatmul.mubr.f32.gmra.mrb[0].mxu0 %v424
      %v562 = vpop.f32.mrb[0].mxu0
      %v563 = vadd.f32 0.0, %v562
      %v564 = vpop.f32.mrb[0].mxu0
      %565 = vmatprep.mubr.f32.mxu0 0.0
      %566 = vmatmul.mubr.f32.gmra.mrb[0].mxu0 %v425
      %v567 = vpop.f32.mrb[0].mxu0
      %v568 = vadd.f32 0.0, %v567
      %v569 = vpop.f32.mrb[0].mxu0
      %570 = vdwg.mxu0
      %s571 = scalar_lea.vmem %s1, 64
      %v572 = vld [vmem:[%s571] sm:$0xff]
      %v573 = vld [vmem:[%s571 + $0x8] sm:$0xff]
      %v574 = vld [vmem:[%s571 + $0x10] sm:$0xff]
      %v575 = vld [vmem:[%s571 + $0x18] sm:$0xff]
      %v576 = vld [vmem:[%s571 + $0x20] sm:$0xff]
      %v577 = vld [vmem:[%s571 + $0x28] sm:$0xff]
      %v578 = vld [vmem:[%s571 + $0x30] sm:$0xff]
      %v579 = vld [vmem:[%s571 + $0x38] sm:$0xff]
      %v580 = vld [vmem:[%s2] sm:$0x1]
      %v582 = vlaneseq
      %v583 = vshrl.u32 %v582, 7
      %v584 = vsub.s32 0, %v583
      %v585 = vrot.slane %v580, %v584
      %vm587 = vcmask 523264
      %v589 = vsel %vm587, %v233, 0
      %v592 = vsel %vm587, %v234, 0
      %v595 = vsel %vm587, %v235, 0
      %v598 = vsel %vm587, %v236, 0
      %v601 = vsel %vm587, %v237, 0
      %v604 = vsel %vm587, %v238, 0
      %v607 = vsel %vm587, %v239, 0
      %v610 = vsel %vm587, %v240, 0
      %v613 = vsel %vm587, %v241, 0
      %v616 = vsel %vm587, %v242, 0
      %v619 = vsel %vm587, %v243, 0
      %v622 = vsel %vm587, %v244, 0
      %v625 = vsel %vm587, %v245, 0
      %v628 = vsel %vm587, %v246, 0
      %v631 = vsel %vm587, %v247, 0
      %v634 = vsel %vm587, %v248, 0
      %636 = vmatprep.subr.mxu0 0.0
      %637 = vmatpush1.msra.mxu0 %v572
      %638 = vmatprep.subr.mxu0 0.0
      %639 = vmatpush1.msra.mxu0 %v573
      %640 = vmatprep.subr.mxu0 0.0
      %641 = vmatpush1.msra.mxu0 %v574
      %642 = vmatprep.subr.mxu0 0.0
      %643 = vmatpush1.msra.mxu0 %v575
      %644 = vmatprep.subr.mxu0 0.0
      %645 = vmatpush1.msra.mxu0 %v576
      %646 = vmatprep.subr.mxu0 0.0
      %647 = vmatpush1.msra.mxu0 %v577
      %648 = vmatprep.subr.mxu0 0.0
      %649 = vmatpush1.msra.mxu0 %v578
      %650 = vmatprep.subr.mxu0 0.0
      %651 = vmatpush1.msra.mxu0 %v579
      %652 = vmatprep.subr.mxu0 0.0
      %653 = vmatpush1.msra.mxu0 0.0
      %654 = vmatprep.subr.mxu0 0.0
      %655 = vmatpush1.msra.mxu0 0.0
      %656 = vmatprep.subr.mxu0 0.0
      %657 = vmatpush1.msra.mxu0 0.0
      %658 = vmatprep.subr.mxu0 0.0
      %659 = vmatpush1.msra.mxu0 0.0
      %660 = vmatprep.subr.mxu0 0.0
      %661 = vmatpush1.msra.mxu0 0.0
      %662 = vmatprep.subr.mxu0 0.0
      %663 = vmatpush1.msra.mxu0 0.0
      %664 = vmatprep.subr.mxu0 0.0
      %665 = vmatpush1.msra.mxu0 0.0
      %666 = vmatprep.subr.mxu0 0.0
      %667 = vmatpush1.msra.mxu0 0.0
      %668 = vmatprep.subr.mxu0 0.0
      %669 = vmatpush1.msra.mxu0 0.0
      %670 = vmatprep.subr.mxu0 0.0
      %671 = vmatpush1.msra.mxu0 0.0
      %672 = vmatprep.subr.mxu0 0.0
      %673 = vmatpush1.msra.mxu0 0.0
      %674 = vmatprep.subr.mxu0 0.0
      %675 = vmatpush1.msra.mxu0 0.0
      %676 = vmatprep.subr.mxu0 0.0
      %677 = vmatpush1.msra.mxu0 0.0
      %678 = vmatprep.subr.mxu0 0.0
      %679 = vmatpush1.msra.mxu0 0.0
      %680 = vmatprep.subr.mxu0 0.0
      %681 = vmatpush1.msra.mxu0 0.0
      %682 = vmatprep.subr.mxu0 0.0
      %683 = vmatpush1.msra.mxu0 0.0
      %684 = vmatprep.subr.mxu0 0.0
      %685 = vmatpush1.msra.mxu0 0.0
      %686 = vmatprep.subr.mxu0 0.0
      %687 = vmatpush1.msra.mxu0 0.0
      %688 = vmatprep.subr.mxu0 0.0
      %689 = vmatpush1.msra.mxu0 0.0
      %690 = vmatprep.subr.mxu0 0.0
      %691 = vmatpush1.msra.mxu0 0.0
      %692 = vmatprep.subr.mxu0 0.0
      %693 = vmatpush1.msra.mxu0 0.0
      %694 = vmatprep.subr.mxu0 0.0
      %695 = vmatpush1.msra.mxu0 0.0
      %696 = vmatprep.subr.mxu0 0.0
      %697 = vmatpush1.msra.mxu0 0.0
      %698 = vmatprep.subr.mxu0 0.0
      %699 = vmatpush1.msra.mxu0 0.0
      %700 = vmatprep.mubr.f32.mxu0 0.0
      %701 = vmatmul.mubr.f32.gmra.mrb[0].mxu0 %v589
      %v702 = vpop.f32.mrb[0].mxu0
      %v703 = vadd.f32 %v585, %v702
      %v704 = vpop.f32.mrb[0].mxu0
      %705 = vmatprep.mubr.f32.mxu0 0.0
      %706 = vmatmul.mubr.f32.gmra.mrb[0].mxu0 %v592
      %v707 = vpop.f32.mrb[0].mxu0
      %v708 = vadd.f32 %v585, %v707
      %v709 = vpop.f32.mrb[0].mxu0
      %710 = vmatprep.mubr.f32.mxu0 0.0
      %711 = vmatmul.mubr.f32.gmra.mrb[0].mxu0 %v595
      %v712 = vpop.f32.mrb[0].mxu0
      %v713 = vadd.f32 %v585, %v712
      %v714 = vpop.f32.mrb[0].mxu0
      %715 = vmatprep.mubr.f32.mxu0 0.0
      %716 = vmatmul.mubr.f32.gmra.mrb[0].mxu0 %v598
      %v717 = vpop.f32.mrb[0].mxu0
      %v718 = vadd.f32 %v585, %v717
      %v719 = vpop.f32.mrb[0].mxu0
      %720 = vmatprep.mubr.f32.mxu0 0.0
      %721 = vmatmul.mubr.f32.gmra.mrb[0].mxu0 %v601
      %v722 = vpop.f32.mrb[0].mxu0
      %v723 = vadd.f32 %v585, %v722
      %v724 = vpop.f32.mrb[0].mxu0
      %725 = vmatprep.mubr.f32.mxu0 0.0
      %726 = vmatmul.mubr.f32.gmra.mrb[0].mxu0 %v604
      %v727 = vpop.f32.mrb[0].mxu0
      %v728 = vadd.f32 %v585, %v727
      %v729 = vpop.f32.mrb[0].mxu0
      %730 = vmatprep.mubr.f32.mxu0 0.0
      %731 = vmatmul.mubr.f32.gmra.mrb[0].mxu0 %v607
      %v732 = vpop.f32.mrb[0].mxu0
      %v733 = vadd.f32 %v585, %v732
      %v734 = vpop.f32.mrb[0].mxu0
      %735 = vmatprep.mubr.f32.mxu0 0.0
      %736 = vmatmul.mubr.f32.gmra.mrb[0].mxu0 %v610
      %v737 = vpop.f32.mrb[0].mxu0
      %v738 = vadd.f32 %v585, %v737
      %v739 = vpop.f32.mrb[0].mxu0
      %740 = vmatprep.mubr.f32.mxu0 0.0
      %741 = vmatmul.mubr.f32.gmra.mrb[0].mxu0 %v613
      %v742 = vpop.f32.mrb[0].mxu0
      %v743 = vadd.f32 %v585, %v742
      %v744 = vpop.f32.mrb[0].mxu0
      %745 = vmatprep.mubr.f32.mxu0 0.0
      %746 = vmatmul.mubr.f32.gmra.mrb[0].mxu0 %v616
      %v747 = vpop.f32.mrb[0].mxu0
      %v748 = vadd.f32 %v585, %v747
      %v749 = vpop.f32.mrb[0].mxu0
      %750 = vmatprep.mubr.f32.mxu0 0.0
      %751 = vmatmul.mubr.f32.gmra.mrb[0].mxu0 %v619
      %v752 = vpop.f32.mrb[0].mxu0
      %v753 = vadd.f32 %v585, %v752
      %v754 = vpop.f32.mrb[0].mxu0
      %755 = vmatprep.mubr.f32.mxu0 0.0
      %756 = vmatmul.mubr.f32.gmra.mrb[0].mxu0 %v622
      %v757 = vpop.f32.mrb[0].mxu0
      %v758 = vadd.f32 %v585, %v757
      %v759 = vpop.f32.mrb[0].mxu0
      %760 = vmatprep.mubr.f32.mxu0 0.0
      %761 = vmatmul.mubr.f32.gmra.mrb[0].mxu0 %v625
      %v762 = vpop.f32.mrb[0].mxu0
      %v763 = vadd.f32 %v585, %v762
      %v764 = vpop.f32.mrb[0].mxu0
      %765 = vmatprep.mubr.f32.mxu0 0.0
      %766 = vmatmul.mubr.f32.gmra.mrb[0].mxu0 %v628
      %v767 = vpop.f32.mrb[0].mxu0
      %v768 = vadd.f32 %v585, %v767
      %v769 = vpop.f32.mrb[0].mxu0
      %770 = vmatprep.mubr.f32.mxu0 0.0
      %771 = vmatmul.mubr.f32.gmra.mrb[0].mxu0 %v631
      %v772 = vpop.f32.mrb[0].mxu0
      %v773 = vadd.f32 %v585, %v772
      %v774 = vpop.f32.mrb[0].mxu0
      %775 = vmatprep.mubr.f32.mxu0 0.0
      %776 = vmatmul.mubr.f32.gmra.mrb[0].mxu0 %v634
      %v777 = vpop.f32.mrb[0].mxu0
      %v778 = vadd.f32 %v585, %v777
      %v779 = vpop.f32.mrb[0].mxu0
      %780 = vdwg.mxu0
      %v781 = vld [vmem:[%s1] sm:$0xff]
      %v782 = vld [vmem:[%s1 + $0x8] sm:$0xff]
      %v783 = vld [vmem:[%s1 + $0x10] sm:$0xff]
      %v784 = vld [vmem:[%s1 + $0x18] sm:$0xff]
      %v785 = vld [vmem:[%s1 + $0x20] sm:$0xff]
      %v786 = vld [vmem:[%s1 + $0x28] sm:$0xff]
      %v787 = vld [vmem:[%s1 + $0x30] sm:$0xff]
      %v788 = vld [vmem:[%s1 + $0x38] sm:$0xff]
      %v790 = vsel %vm587, %v332, 0
      %v793 = vsel %vm587, %v337, 0
      %v796 = vsel %vm587, %v342, 0
      %v799 = vsel %vm587, %v347, 0
      %v802 = vsel %vm587, %v352, 0
      %v805 = vsel %vm587, %v357, 0
      %v808 = vsel %vm587, %v362, 0
      %v811 = vsel %vm587, %v367, 0
      %v814 = vsel %vm587, %v372, 0
      %v817 = vsel %vm587, %v377, 0
      %v820 = vsel %vm587, %v382, 0
      %v823 = vsel %vm587, %v387, 0
      %v826 = vsel %vm587, %v392, 0
      %v829 = vsel %vm587, %v397, 0
      %v832 = vsel %vm587, %v402, 0
      %v835 = vsel %vm587, %v407, 0
      %837 = vmatprep.subr.mxu0 0.0
      %838 = vmatpush1.msra.mxu0 %v781
      %839 = vmatprep.subr.mxu0 0.0
      %840 = vmatpush1.msra.mxu0 %v782
      %841 = vmatprep.subr.mxu0 0.0
      %842 = vmatpush1.msra.mxu0 %v783
      %843 = vmatprep.subr.mxu0 0.0
      %844 = vmatpush1.msra.mxu0 %v784
      %845 = vmatprep.subr.mxu0 0.0
      %846 = vmatpush1.msra.mxu0 %v785
      %847 = vmatprep.subr.mxu0 0.0
      %848 = vmatpush1.msra.mxu0 %v786
      %849 = vmatprep.subr.mxu0 0.0
      %850 = vmatpush1.msra.mxu0 %v787
      %851 = vmatprep.subr.mxu0 0.0
      %852 = vmatpush1.msra.mxu0 %v788
      %853 = vmatprep.subr.mxu0 0.0
      %854 = vmatpush1.msra.mxu0 0.0
      %855 = vmatprep.subr.mxu0 0.0
      %856 = vmatpush1.msra.mxu0 0.0
      %857 = vmatprep.subr.mxu0 0.0
      %858 = vmatpush1.msra.mxu0 0.0
      %859 = vmatprep.subr.mxu0 0.0
      %860 = vmatpush1.msra.mxu0 0.0
      %861 = vmatprep.subr.mxu0 0.0
      %862 = vmatpush1.msra.mxu0 0.0
      %863 = vmatprep.subr.mxu0 0.0
      %864 = vmatpush1.msra.mxu0 0.0
      %865 = vmatprep.subr.mxu0 0.0
      %866 = vmatpush1.msra.mxu0 0.0
      %867 = vmatprep.subr.mxu0 0.0
      %868 = vmatpush1.msra.mxu0 0.0
      %869 = vmatprep.subr.mxu0 0.0
      %870 = vmatpush1.msra.mxu0 0.0
      %871 = vmatprep.subr.mxu0 0.0
      %872 = vmatpush1.msra.mxu0 0.0
      %873 = vmatprep.subr.mxu0 0.0
      %874 = vmatpush1.msra.mxu0 0.0
      %875 = vmatprep.subr.mxu0 0.0
      %876 = vmatpush1.msra.mxu0 0.0
      %877 = vmatprep.subr.mxu0 0.0
      %878 = vmatpush1.msra.mxu0 0.0
      %879 = vmatprep.subr.mxu0 0.0
      %880 = vmatpush1.msra.mxu0 0.0
      %881 = vmatprep.subr.mxu0 0.0
      %882 = vmatpush1.msra.mxu0 0.0
      %883 = vmatprep.subr.mxu0 0.0
      %884 = vmatpush1.msra.mxu0 0.0
      %885 = vmatprep.subr.mxu0 0.0
      %886 = vmatpush1.msra.mxu0 0.0
      %887 = vmatprep.subr.mxu0 0.0
      %888 = vmatpush1.msra.mxu0 0.0
      %889 = vmatprep.subr.mxu0 0.0
      %890 = vmatpush1.msra.mxu0 0.0
      %891 = vmatprep.subr.mxu0 0.0
      %892 = vmatpush1.msra.mxu0 0.0
      %893 = vmatprep.subr.mxu0 0.0
      %894 = vmatpush1.msra.mxu0 0.0
      %895 = vmatprep.subr.mxu0 0.0
      %896 = vmatpush1.msra.mxu0 0.0
      %897 = vmatprep.subr.mxu0 0.0
      %898 = vmatpush1.msra.mxu0 0.0
      %899 = vmatprep.subr.mxu0 0.0
      %900 = vmatpush1.msra.mxu0 0.0
      %901 = vmatprep.mubr.f32.mxu0 0.0
      %902 = vmatmul.mubr.f32.gmra.mrb[0].mxu0 %v790
      %v903 = vpop.f32.mrb[0].mxu0
      %v904 = vadd.f32 0.0, %v903
      %v905 = vpop.f32.mrb[0].mxu0
      %906 = vmatprep.mubr.f32.mxu0 0.0
      %907 = vmatmul.mubr.f32.gmra.mrb[0].mxu0 %v793
      %v908 = vpop.f32.mrb[0].mxu0
      %v909 = vadd.f32 0.0, %v908
      %v910 = vpop.f32.mrb[0].mxu0
      %911 = vmatprep.mubr.f32.mxu0 0.0
      %912 = vmatmul.mubr.f32.gmra.mrb[0].mxu0 %v796
      %v913 = vpop.f32.mrb[0].mxu0
      %v914 = vadd.f32 0.0, %v913
      %v915 = vpop.f32.mrb[0].mxu0
      %916 = vmatprep.mubr.f32.mxu0 0.0
      %917 = vmatmul.mubr.f32.gmra.mrb[0].mxu0 %v799
      %v918 = vpop.f32.mrb[0].mxu0
      %v919 = vadd.f32 0.0, %v918
      %v920 = vpop.f32.mrb[0].mxu0
      %921 = vmatprep.mubr.f32.mxu0 0.0
      %922 = vmatmul.mubr.f32.gmra.mrb[0].mxu0 %v802
      %v923 = vpop.f32.mrb[0].mxu0
      %v924 = vadd.f32 0.0, %v923
      %v925 = vpop.f32.mrb[0].mxu0
      %926 = vmatprep.mubr.f32.mxu0 0.0
      %927 = vmatmul.mubr.f32.gmra.mrb[0].mxu0 %v805
      %v928 = vpop.f32.mrb[0].mxu0
      %v929 = vadd.f32 0.0, %v928
      %v930 = vpop.f32.mrb[0].mxu0
      %931 = vmatprep.mubr.f32.mxu0 0.0
      %932 = vmatmul.mubr.f32.gmra.mrb[0].mxu0 %v808
      %v933 = vpop.f32.mrb[0].mxu0
      %v934 = vadd.f32 0.0, %v933
      %v935 = vpop.f32.mrb[0].mxu0
      %936 = vmatprep.mubr.f32.mxu0 0.0
      %937 = vmatmul.mubr.f32.gmra.mrb[0].mxu0 %v811
      %v938 = vpop.f32.mrb[0].mxu0
      %v939 = vadd.f32 0.0, %v938
      %v940 = vpop.f32.mrb[0].mxu0
      %941 = vmatprep.mubr.f32.mxu0 0.0
      %942 = vmatmul.mubr.f32.gmra.mrb[0].mxu0 %v814
      %v943 = vpop.f32.mrb[0].mxu0
      %v944 = vadd.f32 0.0, %v943
      %v945 = vpop.f32.mrb[0].mxu0
      %946 = vmatprep.mubr.f32.mxu0 0.0
      %947 = vmatmul.mubr.f32.gmra.mrb[0].mxu0 %v817
      %v948 = vpop.f32.mrb[0].mxu0
      %v949 = vadd.f32 0.0, %v948
      %v950 = vpop.f32.mrb[0].mxu0
      %951 = vmatprep.mubr.f32.mxu0 0.0
      %952 = vmatmul.mubr.f32.gmra.mrb[0].mxu0 %v820
      %v953 = vpop.f32.mrb[0].mxu0
      %v954 = vadd.f32 0.0, %v953
      %v955 = vpop.f32.mrb[0].mxu0
      %956 = vmatprep.mubr.f32.mxu0 0.0
      %957 = vmatmul.mubr.f32.gmra.mrb[0].mxu0 %v823
      %v958 = vpop.f32.mrb[0].mxu0
      %v959 = vadd.f32 0.0, %v958
      %v960 = vpop.f32.mrb[0].mxu0
      %961 = vmatprep.mubr.f32.mxu0 0.0
      %962 = vmatmul.mubr.f32.gmra.mrb[0].mxu0 %v826
      %v963 = vpop.f32.mrb[0].mxu0
      %v964 = vadd.f32 0.0, %v963
      %v965 = vpop.f32.mrb[0].mxu0
      %966 = vmatprep.mubr.f32.mxu0 0.0
      %967 = vmatmul.mubr.f32.gmra.mrb[0].mxu0 %v829
      %v968 = vpop.f32.mrb[0].mxu0
      %v969 = vadd.f32 0.0, %v968
      %v970 = vpop.f32.mrb[0].mxu0
      %971 = vmatprep.mubr.f32.mxu0 0.0
      %972 = vmatmul.mubr.f32.gmra.mrb[0].mxu0 %v832
      %v973 = vpop.f32.mrb[0].mxu0
      %v974 = vadd.f32 0.0, %v973
      %v975 = vpop.f32.mrb[0].mxu0
      %976 = vmatprep.mubr.f32.mxu0 0.0
      %977 = vmatmul.mubr.f32.gmra.mrb[0].mxu0 %v835
      %v978 = vpop.f32.mrb[0].mxu0
      %v979 = vadd.f32 0.0, %v978
      %v980 = vpop.f32.mrb[0].mxu0
      %981 = vdwg.mxu0
      %v982 = vadd.f32 %v703, %v904
      %v983 = vadd.f32 %v708, %v909
      %v984 = vadd.f32 %v713, %v914
      %v985 = vadd.f32 %v718, %v919
      %v986 = vadd.f32 %v723, %v924
      %v987 = vadd.f32 %v728, %v929
      %v988 = vadd.f32 %v733, %v934
      %v989 = vadd.f32 %v738, %v939
      %v990 = vadd.f32 %v743, %v944
      %v991 = vadd.f32 %v748, %v949
      %v992 = vadd.f32 %v753, %v954
      %v993 = vadd.f32 %v758, %v959
      %v994 = vadd.f32 %v763, %v964
      %v995 = vadd.f32 %v768, %v969
      %v996 = vadd.f32 %v773, %v974
      %v997 = vadd.f32 %v778, %v979
      %s998 = scalar_lea.vmem %s1, 128
      %v999 = vld [vmem:[%s998] sm:$0xff]
      %v1000 = vld [vmem:[%s998 + $0x8] sm:$0xff]
      %v1001 = vld [vmem:[%s998 + $0x10] sm:$0xff]
      %v1002 = vld [vmem:[%s998 + $0x18] sm:$0xff]
      %v1003 = vld [vmem:[%s998 + $0x20] sm:$0xff]
      %v1004 = vld [vmem:[%s998 + $0x28] sm:$0xff]
      %v1005 = vld [vmem:[%s998 + $0x30] sm:$0xff]
      %v1006 = vld [vmem:[%s998 + $0x38] sm:$0xff]
      %v1008 = vsel %vm587, %v493, 0
      %v1011 = vsel %vm587, %v498, 0
      %v1014 = vsel %vm587, %v503, 0
      %v1017 = vsel %vm587, %v508, 0
      %v1020 = vsel %vm587, %v513, 0
      %v1023 = vsel %vm587, %v518, 0
      %v1026 = vsel %vm587, %v523, 0
      %v1029 = vsel %vm587, %v528, 0
      %v1032 = vsel %vm587, %v533, 0
      %v1035 = vsel %vm587, %v538, 0
      %v1038 = vsel %vm587, %v543, 0
      %v1041 = vsel %vm587, %v548, 0
      %v1044 = vsel %vm587, %v553, 0
      %v1047 = vsel %vm587, %v558, 0
      %v1050 = vsel %vm587, %v563, 0
      %v1053 = vsel %vm587, %v568, 0
      %1055 = vmatprep.subr.mxu0 0.0
      %1056 = vmatpush1.msra.mxu0 %v999
      %1057 = vmatprep.subr.mxu0 0.0
      %1058 = vmatpush1.msra.mxu0 %v1000
      %1059 = vmatprep.subr.mxu0 0.0
      %1060 = vmatpush1.msra.mxu0 %v1001
      %1061 = vmatprep.subr.mxu0 0.0
      %1062 = vmatpush1.msra.mxu0 %v1002
      %1063 = vmatprep.subr.mxu0 0.0
      %1064 = vmatpush1.msra.mxu0 %v1003
      %1065 = vmatprep.subr.mxu0 0.0
      %1066 = vmatpush1.msra.mxu0 %v1004
      %1067 = vmatprep.subr.mxu0 0.0
      %1068 = vmatpush1.msra.mxu0 %v1005
      %1069 = vmatprep.subr.mxu0 0.0
      %1070 = vmatpush1.msra.mxu0 %v1006
      %1071 = vmatprep.subr.mxu0 0.0
      %1072 = vmatpush1.msra.mxu0 0.0
      %1073 = vmatprep.subr.mxu0 0.0
      %1074 = vmatpush1.msra.mxu0 0.0
      %1075 = vmatprep.subr.mxu0 0.0
      %1076 = vmatpush1.msra.mxu0 0.0
      %1077 = vmatprep.subr.mxu0 0.0
      %1078 = vmatpush1.msra.mxu0 0.0
      %1079 = vmatprep.subr.mxu0 0.0
      %1080 = vmatpush1.msra.mxu0 0.0
      %1081 = vmatprep.subr.mxu0 0.0
      %1082 = vmatpush1.msra.mxu0 0.0
      %1083 = vmatprep.subr.mxu0 0.0
      %1084 = vmatpush1.msra.mxu0 0.0
      %1085 = vmatprep.subr.mxu0 0.0
      %1086 = vmatpush1.msra.mxu0 0.0
      %1087 = vmatprep.subr.mxu0 0.0
      %1088 = vmatpush1.msra.mxu0 0.0
      %1089 = vmatprep.subr.mxu0 0.0
      %1090 = vmatpush1.msra.mxu0 0.0
      %1091 = vmatprep.subr.mxu0 0.0
      %1092 = vmatpush1.msra.mxu0 0.0
      %1093 = vmatprep.subr.mxu0 0.0
      %1094 = vmatpush1.msra.mxu0 0.0
      %1095 = vmatprep.subr.mxu0 0.0
      %1096 = vmatpush1.msra.mxu0 0.0
      %1097 = vmatprep.subr.mxu0 0.0
      %1098 = vmatpush1.msra.mxu0 0.0
      %1099 = vmatprep.subr.mxu0 0.0
      %1100 = vmatpush1.msra.mxu0 0.0
      %1101 = vmatprep.subr.mxu0 0.0
      %1102 = vmatpush1.msra.mxu0 0.0
      %1103 = vmatprep.subr.mxu0 0.0
      %1104 = vmatpush1.msra.mxu0 0.0
      %1105 = vmatprep.subr.mxu0 0.0
      %1106 = vmatpush1.msra.mxu0 0.0
      %1107 = vmatprep.subr.mxu0 0.0
      %1108 = vmatpush1.msra.mxu0 0.0
      %1109 = vmatprep.subr.mxu0 0.0
      %1110 = vmatpush1.msra.mxu0 0.0
      %1111 = vmatprep.subr.mxu0 0.0
      %1112 = vmatpush1.msra.mxu0 0.0
      %1113 = vmatprep.subr.mxu0 0.0
      %1114 = vmatpush1.msra.mxu0 0.0
      %1115 = vmatprep.subr.mxu0 0.0
      %1116 = vmatpush1.msra.mxu0 0.0
      %1117 = vmatprep.subr.mxu0 0.0
      %1118 = vmatpush1.msra.mxu0 0.0
      %1119 = vmatprep.mubr.f32.mxu0 0.0
      %1120 = vmatmul.mubr.f32.gmra.mrb[0].mxu0 %v1008
      %v1121 = vpop.f32.mrb[0].mxu0
      %v1122 = vadd.f32 0.0, %v1121
      %v1123 = vpop.f32.mrb[0].mxu0
      %1124 = vmatprep.mubr.f32.mxu0 0.0
      %1125 = vmatmul.mubr.f32.gmra.mrb[0].mxu0 %v1011
      %v1126 = vpop.f32.mrb[0].mxu0
      %v1127 = vadd.f32 0.0, %v1126
      %v1128 = vpop.f32.mrb[0].mxu0
      %1129 = vmatprep.mubr.f32.mxu0 0.0
      %1130 = vmatmul.mubr.f32.gmra.mrb[0].mxu0 %v1014
      %v1131 = vpop.f32.mrb[0].mxu0
      %v1132 = vadd.f32 0.0, %v1131
      %v1133 = vpop.f32.mrb[0].mxu0
      %1134 = vmatprep.mubr.f32.mxu0 0.0
      %1135 = vmatmul.mubr.f32.gmra.mrb[0].mxu0 %v1017
      %v1136 = vpop.f32.mrb[0].mxu0
      %v1137 = vadd.f32 0.0, %v1136
      %v1138 = vpop.f32.mrb[0].mxu0
      %1139 = vmatprep.mubr.f32.mxu0 0.0
      %1140 = vmatmul.mubr.f32.gmra.mrb[0].mxu0 %v1020
      %v1141 = vpop.f32.mrb[0].mxu0
      %v1142 = vadd.f32 0.0, %v1141
      %v1143 = vpop.f32.mrb[0].mxu0
      %1144 = vmatprep.mubr.f32.mxu0 0.0
      %1145 = vmatmul.mubr.f32.gmra.mrb[0].mxu0 %v1023
      %v1146 = vpop.f32.mrb[0].mxu0
      %v1147 = vadd.f32 0.0, %v1146
      %v1148 = vpop.f32.mrb[0].mxu0
      %1149 = vmatprep.mubr.f32.mxu0 0.0
      %1150 = vmatmul.mubr.f32.gmra.mrb[0].mxu0 %v1026
      %v1151 = vpop.f32.mrb[0].mxu0
      %v1152 = vadd.f32 0.0, %v1151
      %v1153 = vpop.f32.mrb[0].mxu0
      %1154 = vmatprep.mubr.f32.mxu0 0.0
      %1155 = vmatmul.mubr.f32.gmra.mrb[0].mxu0 %v1029
      %v1156 = vpop.f32.mrb[0].mxu0
      %v1157 = vadd.f32 0.0, %v1156
      %v1158 = vpop.f32.mrb[0].mxu0
      %1159 = vmatprep.mubr.f32.mxu0 0.0
      %1160 = vmatmul.mubr.f32.gmra.mrb[0].mxu0 %v1032
      %v1161 = vpop.f32.mrb[0].mxu0
      %v1162 = vadd.f32 0.0, %v1161
      %v1163 = vpop.f32.mrb[0].mxu0
      %1164 = vmatprep.mubr.f32.mxu0 0.0
      %1165 = vmatmul.mubr.f32.gmra.mrb[0].mxu0 %v1035
      %v1166 = vpop.f32.mrb[0].mxu0
      %v1167 = vadd.f32 0.0, %v1166
      %v1168 = vpop.f32.mrb[0].mxu0
      %1169 = vmatprep.mubr.f32.mxu0 0.0
      %1170 = vmatmul.mubr.f32.gmra.mrb[0].mxu0 %v1038
      %v1171 = vpop.f32.mrb[0].mxu0
      %v1172 = vadd.f32 0.0, %v1171
      %v1173 = vpop.f32.mrb[0].mxu0
      %1174 = vmatprep.mubr.f32.mxu0 0.0
      %1175 = vmatmul.mubr.f32.gmra.mrb[0].mxu0 %v1041
      %v1176 = vpop.f32.mrb[0].mxu0
      %v1177 = vadd.f32 0.0, %v1176
      %v1178 = vpop.f32.mrb[0].mxu0
      %1179 = vmatprep.mubr.f32.mxu0 0.0
      %1180 = vmatmul.mubr.f32.gmra.mrb[0].mxu0 %v1044
      %v1181 = vpop.f32.mrb[0].mxu0
      %v1182 = vadd.f32 0.0, %v1181
      %v1183 = vpop.f32.mrb[0].mxu0
      %1184 = vmatprep.mubr.f32.mxu0 0.0
      %1185 = vmatmul.mubr.f32.gmra.mrb[0].mxu0 %v1047
      %v1186 = vpop.f32.mrb[0].mxu0
      %v1187 = vadd.f32 0.0, %v1186
      %v1188 = vpop.f32.mrb[0].mxu0
      %1189 = vmatprep.mubr.f32.mxu0 0.0
      %1190 = vmatmul.mubr.f32.gmra.mrb[0].mxu0 %v1050
      %v1191 = vpop.f32.mrb[0].mxu0
      %v1192 = vadd.f32 0.0, %v1191
      %v1193 = vpop.f32.mrb[0].mxu0
      %1194 = vmatprep.mubr.f32.mxu0 0.0
      %1195 = vmatmul.mubr.f32.gmra.mrb[0].mxu0 %v1053
      %v1196 = vpop.f32.mrb[0].mxu0
      %v1197 = vadd.f32 0.0, %v1196
      %v1198 = vpop.f32.mrb[0].mxu0
      %1199 = vdwg.mxu0
      %v1200 = vadd.f32 %v982, %v1122
      %v1201 = vadd.f32 %v983, %v1127
      %v1202 = vadd.f32 %v984, %v1132
      %v1203 = vadd.f32 %v985, %v1137
      %v1204 = vadd.f32 %v986, %v1142
      %v1205 = vadd.f32 %v987, %v1147
      %v1206 = vadd.f32 %v988, %v1152
      %v1207 = vadd.f32 %v989, %v1157
      %v1208 = vadd.f32 %v990, %v1162
      %v1209 = vadd.f32 %v991, %v1167
      %v1210 = vadd.f32 %v992, %v1172
      %v1211 = vadd.f32 %v993, %v1177
      %v1212 = vadd.f32 %v994, %v1182
      %v1213 = vadd.f32 %v995, %v1187
      %v1214 = vadd.f32 %v996, %v1192
      %v1215 = vadd.f32 %v997, %v1197
      %1216 = vst [vmem:[%s231] sm:$0xff] %v1200
      %1217 = vst [vmem:[%s231 + $0x8] sm:$0xff] %v1201
      %1218 = vst [vmem:[%s231 + $0x10] sm:$0xff] %v1202
      %1219 = vst [vmem:[%s231 + $0x18] sm:$0xff] %v1203
      %1220 = vst [vmem:[%s231 + $0x20] sm:$0xff] %v1204
      %1221 = vst [vmem:[%s231 + $0x28] sm:$0xff] %v1205
      %1222 = vst [vmem:[%s231 + $0x30] sm:$0xff] %v1206
      %1223 = vst [vmem:[%s231 + $0x38] sm:$0xff] %v1207
      %1224 = vst [vmem:[%s231 + $0x40] sm:$0xff] %v1208
      %1225 = vst [vmem:[%s231 + $0x48] sm:$0xff] %v1209
      %1226 = vst [vmem:[%s231 + $0x50] sm:$0xff] %v1210
      %1227 = vst [vmem:[%s231 + $0x58] sm:$0xff] %v1211
      %1228 = vst [vmem:[%s231 + $0x60] sm:$0xff] %v1212
      %1229 = vst [vmem:[%s231 + $0x68] sm:$0xff] %v1213
      %1230 = vst [vmem:[%s231 + $0x70] sm:$0xff] %v1214
      %1231 = vst [vmem:[%s231 + $0x78] sm:$0xff] %v1215
      %s1232 = smul.u32 8, %s16
      %p1233 = scmp.lt.s32.totalorder %s1232, 15
      %s1234 = scalar_select %p1233, %s1232, 15
      %s1235 = smul.addr %s1234, 2
      %s1236 = smul.addr %s1235, 8
      %s1237 = scalar_lea.vmem %s5, %s1236
      // Predicated region
      $region41: #{time_distributed_conv2d.1} parent=39 // pred_check
        %p1238 = pneg %p144
      $region42: #{time_distributed_conv2d.1} parent=39 // pred_check_branch
        %1240 = sbr.rel (%p1238) target = $region44
      $region43: #{time_distributed_conv2d.1} parent=39 // pred_region
        %s1241 = smul.u32 8, %s16
      $region44: #{time_distributed_conv2d.1} parent=39 // pred_fallthru
        _
    $region40: #{time_distributed_conv2d.1} parent=5 // pred_fallthru
      _
    %p1242 = scmp.le.s32.totalorder 2, %s11
    // Predicated region
    $region45: #{time_distributed_conv2d.1} parent=5 // pred_check
      %p1243 = pneg %p1242
    $region46: #{time_distributed_conv2d.1} parent=5 // pred_check_branch
      %1245 = sbr.rel (%p1243) target = $region48
    $region47: #{time_distributed_conv2d.1} parent=5 // pred_region
      %s1246 = ssub.s32 %s11, 2
      // Predicated region
      $region49: #{time_distributed_conv2d.1} parent=47 // pred_check
        %p1247 = pneg %p150
      $region50: #{time_distributed_conv2d.1} parent=47 // pred_check_branch
        %1249 = sbr.rel (%p1247) target = $region52
      $region51: #{time_distributed_conv2d.1} parent=47 // pred_region
        %s1250 = smul.u32 8, %s17
        %p1251 = scmp.lt.s32.totalorder %s1250, 15
        %s1252 = scalar_select %p1251, %s1250, 15
        %s1253 = smul.addr %s1252, 2
        %s1254 = smul.addr %s1253, 8
        %s1255 = scalar_lea.vmem %s5, %s1254
      $region52: #{time_distributed_conv2d.1} parent=47 // pred_fallthru
        _
    $region48: #{time_distributed_conv2d.1} parent=5 // pred_fallthru
      _
  $region6: #{time_distributed_conv2d.1} parent=0 // loop_footer
    %s15 = sadd.s32 1, %s11
  $region7: #{time_distributed_conv2d.1} parent=0 // loop_footer_branch
    %10 = sbr.rel target = $region3
  $region8: #{time_distributed_conv2d.1} parent=0 // loop_exit
    _

</llo_original>
